<compile_context>
chip_gen: v5e
topology: v5e:2x2
jax: 0.10.0
libtpu: 0.0.40
codegen_flags: <defaults>
</compile_context>

<pallas_src>
import jax
import jax.numpy as jnp
from jax.experimental import pallas as pl
from jax.experimental.pallas import tpu as pltpu

IN_DIM = 11      # observation features
HID_DIM = 16     # affine1 output
OUT_DIM = 2      # affine2 output
PACK = 8         # rows packed per lane group (8 * 16 = 128 hidden lanes)

PK_IN = PACK * IN_DIM     # 88
PK_HID = PACK * HID_DIM   # 128
PK_OUT = PACK * OUT_DIM   # 16


def _policy_kernel(x_ref, w1_ref, b1_ref, w2_ref, b2_ref, o_ref):
    """One batch tile, packed layout (8 original rows per packed row).

    x_ref : [BR, 88]   f32/bf16  packed observations (8 rows of 11 features)
    w1_ref: [88, 128]  bf16      block-diag: 8 copies of W1^T
    b1_ref: [1, 128]   f32       b1 tiled 8x
    w2_ref: [128, 16]  bf16      block-diag: 8 copies of W2^T
    b2_ref: [1, 16]    f32       b2 tiled 8x
    o_ref : [BR, 16]   f32       packed outputs (8 rows of 2 logits)
    """
    # Hardtanh(0, 1) in the input's native dtype (0/1 are exact in bf16, so
    # clip commutes with the cast), then bf16 operands for the MXU.
    x = jnp.clip(x_ref[...], 0.0, 1.0).astype(jnp.bfloat16)

    # h_packed[r, c*16 + j] = (clamp01(x[8r+c]) @ W1^T)[j]   (f32 accumulate)
    h = jnp.dot(x, w1_ref[...], preferred_element_type=jnp.float32)
    h = jnp.clip(h + b1_ref[...], 0.0, 1.0)                  # bias + Hardtanh

    # y_packed[r, c*2 + j] = (h[8r+c] @ W2^T)[j]
    y = jnp.dot(h.astype(jnp.bfloat16), w2_ref[...],
                preferred_element_type=jnp.float32)
    o_ref[...] = jax.nn.sigmoid(y + b2_ref[...])             # EUP sigmoid


def _round_up(n, m):
    return ((n + m - 1) // m) * m


def _pack_params(w1, b1, w2, b2):
    """Build block-diagonal packed weights (bf16) and tiled biases (f32)."""
    w1 = w1.astype(jnp.float32)
    w2 = w2.astype(jnp.float32)
    eye = jnp.eye(PACK, dtype=jnp.float32)
    # bd[c*in + i, d*out + j] = delta_{cd} * W^T[i, j]
    w1p = jnp.einsum("cd,ij->cidj", eye, w1.T).reshape(PK_IN, PK_HID)
    w2p = jnp.einsum("cd,ij->cidj", eye, w2.T).reshape(PK_HID, PK_OUT)
    b1t = jnp.tile(b1.astype(jnp.float32), PACK).reshape(1, PK_HID)
    b2t = jnp.tile(b2.astype(jnp.float32), PACK).reshape(1, PK_OUT)
    return w1p.astype(jnp.bfloat16), b1t, w2p.astype(jnp.bfloat16), b2t


def policy_forward_pallas(x, w1, b1, w2, b2, *, block_b=16384):
    """Batch-tiled Pallas forward.

    x: [B, 11] (f32 or bf16).  Params in PyTorch nn.Linear layout:
    w1: [16, 11], b1: [16], w2: [2, 16], b2: [2].  Returns [B, 2] f32.
    block_b is the batch-tile size in *original* rows.
    """
    if x.dtype not in (jnp.float32, jnp.bfloat16):
        x = x.astype(jnp.float32)
    B = x.shape[0]

    # Pad batch to a multiple of PACK so the [B, 11] -> [B/8, 88] view exists.
    B_pad = _round_up(max(B, PACK), PACK)
    if B_pad != B:
        x = jnp.pad(x, ((0, B_pad - B), (0, 0)))
    R = B_pad // PACK                     # packed rows
    xp = x.reshape(R, PK_IN)              # free contiguous view

    # ---- choose the tile size (in packed rows) ----
    # Lane-padded VMEM per packed row: double-buffered x + double-buffered out
    # + generous allowance for in-kernel f32 temporaries (h, y, casts).
    itemsize = x.dtype.itemsize
    per_row_bytes = 2 * 128 * itemsize + 2 * 128 * 4 + 6 * 128 * 4
    vmem_budget = 20 * 1024 * 1024        # leaves headroom under the 32 MiB cap
    budget_rows = max(8, (vmem_budget // per_row_bytes) // 8 * 8)

    target_rows = max(8, (int(block_b) // PACK) // 8 * 8)
    br = min(target_rows, budget_rows, _round_up(R, 8))
    # v7x megacore: once the batch is big enough that per-step overhead is
    # negligible, keep >= 4 grid steps so both TensorCores stay busy.
    if R >= 4 * 64:
        br = min(br, _round_up(pl.cdiv(R, 4), 8))
    br = max(8, br)

    grid = (pl.cdiv(R, br),)
    w1p, b1t, w2p, b2t = _pack_params(w1, b1, w2, b2)

    out_p = pl.pallas_call(
        _policy_kernel,
        out_shape=jax.ShapeDtypeStruct((R, PK_OUT), jnp.float32),
        grid=grid,
        in_specs=[
            # x: tiled over the packed-batch axis; params: constant index maps
            # so they stay VMEM-resident across all grid steps (no re-DMA).
            pl.BlockSpec((br, PK_IN), lambda i: (i, 0)),
            pl.BlockSpec((PK_IN, PK_HID), lambda i: (0, 0)),
            pl.BlockSpec((1, PK_HID), lambda i: (0, 0)),
            pl.BlockSpec((PK_HID, PK_OUT), lambda i: (0, 0)),
            pl.BlockSpec((1, PK_OUT), lambda i: (0, 0)),
        ],
        out_specs=pl.BlockSpec((br, PK_OUT), lambda i: (i, 0)),
        compiler_params=pltpu.CompilerParams(
            dimension_semantics=("parallel",),
            vmem_limit_bytes=32 * 1024 * 1024,
        ),
    )(xp, w1p, b1t, w2p, b2t)

    out = out_p.reshape(B_pad, OUT_DIM)   # free view back to [B_pad, 2]
    if B_pad != B:
        out = out[:B]
    return out


def policy_forward_ref(x, w1, b1, w2, b2, *, cast_bf16=False):
    """Pure-JAX reference (PyTorch param layout).  cast_bf16=True mirrors the
    kernel's bf16-operand / f32-accumulate matmuls for a tight check."""
    x = x.astype(jnp.float32)
    c = (lambda a: a.astype(jnp.bfloat16)) if cast_bf16 else (lambda a: a)
    h = jnp.dot(c(jnp.clip(x, 0.0, 1.0)), c(w1).T,
                preferred_element_type=jnp.float32) + b1
    h = jnp.clip(h, 0.0, 1.0)
    y = jnp.dot(c(h), c(w2).T, preferred_element_type=jnp.float32) + b2
    return jax.nn.sigmoid(y)


def policy_forward(x, w1, b1, w2, b2, *, block_b=16384, min_pallas_batch=1024):
    """Dispatcher: tiny batches go through plain XLA (kernel launch + DMA setup
    overhead dwarfs ~3 KFLOP of useful work); large batches use Pallas.
    Note: the Pallas path uses bf16 MXU operands, so results differ from the
    f32 XLA path by ~bf16 rounding across the threshold (harmless here)."""
    if x.ndim != 2 or x.shape[0] < min_pallas_batch:
        return policy_forward_ref(x, w1, b1, w2, b2)
    return policy_forward_pallas(x, w1, b1, w2, b2, block_b=block_b)


def init_params(key):
    """PyTorch nn.Linear-style init: U(-1/sqrt(fan_in), 1/sqrt(fan_in)),
    with weights in PyTorch's [out, in] layout."""
    k1, k2, k3, k4 = jax.random.split(key, 4)
    bound1 = 1.0 / jnp.sqrt(float(IN_DIM))
    bound2 = 1.0 / jnp.sqrt(float(HID_DIM))
    w1 = jax.random.uniform(k1, (HID_DIM, IN_DIM), jnp.float32, -bound1, bound1)
    b1 = jax.random.uniform(k2, (HID_DIM,), jnp.float32, -bound1, bound1)
    w2 = jax.random.uniform(k3, (OUT_DIM, HID_DIM), jnp.float32, -bound2, bound2)
    b2 = jax.random.uniform(k4, (OUT_DIM,), jnp.float32, -bound2, bound2)
    return w1, b1, w2, b2


# TODO(synk): saved_log_probs / rewards buffers and Categorical sampling are
# training-loop state, not part of the forward pass; not implemented.

if __name__ == "__main__":
    key = jax.random.PRNGKey(0)
    kx, kp = jax.random.split(key)

    # Small, deliberately ragged batch (not a multiple of 8 or of the tile) so
    # the pad-to-8 packing, multi-step pipelined grid and the partial-last-tile
    # writeback are all exercised.  block_b=128 -> 16 packed rows per step ->
    # a 3-step grid here; production uses the default 16384.
    B = 300
    x = jax.random.normal(kx, (B, IN_DIM), jnp.float32)
    w1, b1, w2, b2 = init_params(kp)

    out = policy_forward_pallas(x, w1, b1, w2, b2, block_b=128)
    out = jax.block_until_ready(out)
    assert out.shape == (B, OUT_DIM)

    # Tight check vs a reference using the same bf16 MXU operands.
    ref_bf16 = policy_forward_ref(x, w1, b1, w2, b2, cast_bf16=True)
    assert jnp.allclose(out, ref_bf16, atol=1e-3), (
        "max |diff| vs bf16 ref = %g" % float(jnp.max(jnp.abs(out - ref_bf16))))

    # Loose check vs the full-f32 reference (difference is bf16 operand
    # rounding only; well within tolerance for a [0,1]-clamped policy head).
    ref_f32 = policy_forward_ref(x, w1, b1, w2, b2, cast_bf16=False)
    assert jnp.allclose(out, ref_f32, atol=5e-2), (
        "max |diff| vs f32 ref = %g" % float(jnp.max(jnp.abs(out - ref_f32))))

    # Default tile config (single partial block) must also agree.
    out2 = jax.block_until_ready(policy_forward_pallas(x, w1, b1, w2, b2))
    assert jnp.allclose(out2, ref_bf16, atol=1e-3)

    print("KERNEL_OK")
</pallas_src>

<mosaic_0001>
module attributes {stable_mosaic.version = 11 : i64} {
  func.func @_policy_kernel(%arg0: i32, %arg1: memref<16x88xf32, #tpu.memory_space<vmem>>, %arg2: memref<88x128xbf16, #tpu.memory_space<vmem>>, %arg3: memref<1x128xf32, #tpu.memory_space<vmem>>, %arg4: memref<128x16xbf16, #tpu.memory_space<vmem>>, %arg5: memref<1x16xf32, #tpu.memory_space<vmem>>, %arg6: memref<16x16xf32, #tpu.memory_space<vmem>>) attributes {dimension_semantics = [#tpu.dimension_semantics<parallel>], iteration_bounds = array<i64: 3>, scalar_prefetch = 0 : i64, scratch_operands = 0 : i64, tpu.core_type = #tpu.core_type<tc>, window_params = [{transform_indices = @transform_0, window_bounds = array<i64: 16, 88>}, {pipeline_mode = #tpu.pipeline_mode<synchronous>, transform_indices = @transform_1, window_bounds = array<i64: 88, 128>}, {pipeline_mode = #tpu.pipeline_mode<synchronous>, transform_indices = @transform_2, window_bounds = array<i64: 1, 128>}, {pipeline_mode = #tpu.pipeline_mode<synchronous>, transform_indices = @transform_3, window_bounds = array<i64: 128, 16>}, {pipeline_mode = #tpu.pipeline_mode<synchronous>, transform_indices = @transform_4, window_bounds = array<i64: 1, 16>}, {transform_indices = @transform_5, window_bounds = array<i64: 16, 16>}]} {
    %c0 = arith.constant 0 : index
    %c0_0 = arith.constant 0 : index
    %0 = vector.load %arg1[%c0, %c0_0] : memref<16x88xf32, #tpu.memory_space<vmem>>, vector<16x88xf32>
    %cst = arith.constant 0.000000e+00 : f32
    %cst_1 = arith.constant 1.000000e+00 : f32
    %1 = vector.broadcast %cst : f32 to vector<16x88xf32>
    %2 = arith.maximumf %1, %0 : vector<16x88xf32>
    %3 = vector.broadcast %cst_1 : f32 to vector<16x88xf32>
    %4 = arith.minimumf %3, %2 : vector<16x88xf32>
    %5 = arith.truncf %4 : vector<16x88xf32> to vector<16x88xbf16>
    %c0_2 = arith.constant 0 : index
    %c0_3 = arith.constant 0 : index
    %6 = vector.load %arg2[%c0_2, %c0_3] : memref<88x128xbf16, #tpu.memory_space<vmem>>, vector<88x128xbf16>
    %cst_4 = arith.constant dense<0.000000e+00> : vector<16x128xf32>
    %7 = tpu.matmul %5, %6, %cst_4 {dimension_numbers = #tpu.dot_dimension_numbers<[1], [0], [0], [1], [0, 0, 1, 1], [], []>} : vector<16x88xbf16>, vector<88x128xbf16>, vector<16x128xf32> -> vector<16x128xf32>
    %c0_5 = arith.constant 0 : index
    %c0_6 = arith.constant 0 : index
    %8 = vector.load %arg3[%c0_5, %c0_6] : memref<1x128xf32, #tpu.memory_space<vmem>>, vector<1x128xf32>
    %9 = vector.broadcast %8 : vector<1x128xf32> to vector<16x128xf32>
    %10 = arith.addf %7, %9 : vector<16x128xf32>
    %cst_7 = arith.constant 0.000000e+00 : f32
    %cst_8 = arith.constant 1.000000e+00 : f32
    %11 = vector.broadcast %cst_7 : f32 to vector<16x128xf32>
    %12 = arith.maximumf %11, %10 : vector<16x128xf32>
    %13 = vector.broadcast %cst_8 : f32 to vector<16x128xf32>
    %14 = arith.minimumf %13, %12 : vector<16x128xf32>
    %15 = arith.truncf %14 : vector<16x128xf32> to vector<16x128xbf16>
    %c0_9 = arith.constant 0 : index
    %c0_10 = arith.constant 0 : index
    %16 = vector.load %arg4[%c0_9, %c0_10] : memref<128x16xbf16, #tpu.memory_space<vmem>>, vector<128x16xbf16>
    %cst_11 = arith.constant dense<0.000000e+00> : vector<16x16xf32>
    %17 = tpu.matmul %15, %16, %cst_11 {dimension_numbers = #tpu.dot_dimension_numbers<[1], [0], [0], [1], [0, 0, 1, 1], [], []>} : vector<16x128xbf16>, vector<128x16xbf16>, vector<16x16xf32> -> vector<16x16xf32>
    %c0_12 = arith.constant 0 : index
    %c0_13 = arith.constant 0 : index
    %18 = vector.load %arg5[%c0_12, %c0_13] : memref<1x16xf32, #tpu.memory_space<vmem>>, vector<1x16xf32>
    %19 = vector.broadcast %18 : vector<1x16xf32> to vector<16x16xf32>
    %20 = arith.addf %17, %19 : vector<16x16xf32>
    %21 = arith.negf %20 : vector<16x16xf32>
    %22 = math.exp %21 : vector<16x16xf32>
    %cst_14 = arith.constant 1.000000e+00 : f32
    %23 = vector.broadcast %cst_14 : f32 to vector<16x16xf32>
    %24 = arith.addf %23, %22 : vector<16x16xf32>
    %25 = arith.divf %23, %24 : vector<16x16xf32>
    %c0_15 = arith.constant 0 : index
    %c0_16 = arith.constant 0 : index
    %26 = vector.load %arg6[%c0_15, %c0_16] : memref<16x16xf32, #tpu.memory_space<vmem>>, vector<16x16xf32>
    tpu.vector_store %arg6[%c0_15, %c0_16], %25 {strides = array<i32>} : memref<16x16xf32, #tpu.memory_space<vmem>>, vector<16x16xf32>,
    return
  }
  func.func @transform_0(%arg0: i32) -> (i32, i32) {
    %c0_i32 = arith.constant 0 : i32
    %c0_i32_0 = arith.constant 0 : i32
    return %arg0, %c0_i32 : i32, i32
  }
  func.func @transform_1(%arg0: i32) -> (i32, i32) {
    %c0_i32 = arith.constant 0 : i32
    %c0_i32_0 = arith.constant 0 : i32
    %c0_i32_1 = arith.constant 0 : i32
    return %c0_i32, %c0_i32_0 : i32, i32
  }
  func.func @transform_2(%arg0: i32) -> (i32, i32) {
    %c0_i32 = arith.constant 0 : i32
    %c0_i32_0 = arith.constant 0 : i32
    %c0_i32_1 = arith.constant 0 : i32
    return %c0_i32, %c0_i32_0 : i32, i32
  }
  func.func @transform_3(%arg0: i32) -> (i32, i32) {
    %c0_i32 = arith.constant 0 : i32
    %c0_i32_0 = arith.constant 0 : i32
    %c0_i32_1 = arith.constant 0 : i32
    return %c0_i32, %c0_i32_0 : i32, i32
  }
  func.func @transform_4(%arg0: i32) -> (i32, i32) {
    %c0_i32 = arith.constant 0 : i32
    %c0_i32_0 = arith.constant 0 : i32
    %c0_i32_1 = arith.constant 0 : i32
    return %c0_i32, %c0_i32_0 : i32, i32
  }
  func.func @transform_5(%arg0: i32) -> (i32, i32) {
    %c0_i32 = arith.constant 0 : i32
    %c0_i32_0 = arith.constant 0 : i32
    return %arg0, %c0_i32 : i32, i32
  }
}

</mosaic_0001>

<llo_original>
// kernel: tpu_custom_call.1
$region0: #{tpu_custom_call.1}
  #allocation0 [shape = 'u32[]', space=smem, size = 0x4, offset = 0x4, fixed_abs, tag = 'smem constant byte address 0x4 - core index']
  #allocation1 [shape = 'u32[72,128]{1,0:T(1,128)}', space=vmem, size = 0x9000, scoped, tag = 'internal scratch']
  %s0 = inlined_call_operand.hbm [shape: f32[38,88], index: 0, kind: input, shape index: {}]
  %s1 = inlined_call_operand.vmem [shape: bf16[88,128], index: 1, kind: input, shape index: {}]
  %s2 = inlined_call_operand.vmem [shape: f32[1,128], index: 2, kind: input, shape index: {}]
  %s3 = inlined_call_operand.vmem [shape: bf16[128,16], index: 3, kind: input, shape index: {}]
  %s4 = inlined_call_operand.vmem [shape: f32[1,16], index: 4, kind: input, shape index: {}]
  %s5 = inlined_call_operand.vmem [shape: f32[38,16], index: 5, kind: output, shape index: {}]
  %s6 = sld [smem:[#allocation0]]
  $region105: #{tpu_custom_call.1} parent=0
    _
  %s8 = ssub.s32 1, %s6
  %s9 = scalar_select 0, %s8, %s6
  $region1: #{tpu_custom_call.1} parent=0
    #allocation2 [shape = 'u8[16384]{0}', space=vmem, size = 0x4000, scoped, tag = 'input window, operand 0']
    #allocation3 [shape = 's32[2]{0}', space=sflag, size = 0x8, scoped, tag = 'scoped memory for tpu_custom_call.1']
    #allocation4 [shape = 'u8[16384]{0}', space=vmem, size = 0x4000, scoped, tag = 'output window, operand 0']
    %10 = vsyncpa [#allocation3], 0
    %s11 = scalar_lea.sflag [#allocation3], 1
    %12 = vsyncpa %s11, 0
    loop: start=0, step=1, limit=5
    $region2: #{tpu_custom_call.1} parent=1 // loop_pre_header
      _
    $region3: #{tpu_custom_call.1} parent=1 // loop_header
      %s14 = sphi 0, %s18
      %p15 = scmp.ge.s32.totalorder %s14, 5
      %s24 = sphi 0, %s26
      %s27 = sphi 0, %s24
      %s28 = sphi 0, %s27
      %s44 = sphi 0, %s28
      %s48 = sphi 0, %s48
      %s50 = sphi 0, %s48
      %s51 = sphi 0, %s50
      %s65 = sphi 0, %s51
      %s69 = sphi 0, %s69
      %s71 = sphi 0, %s69
      %s72 = sphi 0, %s71
      %s86 = sphi 0, %s72
      %s90 = sphi 0, %s90
      %s92 = sphi 0, %s90
      %s93 = sphi 0, %s92
      %s107 = sphi 0, %s93
      %s111 = sphi 0, %s111
      %s113 = sphi 0, %s111
      %s114 = sphi 0, %s113
      %s128 = sphi 0, %s114
      %s134 = sphi 0, %s136
      %s137 = sphi 0, %s134
      %s138 = sphi 0, %s137
      %s154 = sphi 0, %s138
    $region4: #{tpu_custom_call.1} parent=1 // loop_header_branch
      %17 = sbr.rel (%p15) target = $region8
    $region5: #{tpu_custom_call.1} parent=1 // loop_body
      %s19 = ssub.s32 %s14, 1
      %s20 = ssub.s32 %s14, 2
      %s21 = sadd.s32 %s14, 1
      %s22 = ssub.s32 %s14, %s21
      %p23 = scmp.eq.s32.totalorder %s22, 0
      %s25 = sadd.s32 %s24, 1
      %s26 = scalar_select %p23, %s24, %s25
      %p29 = pneg %p23
      %p30 = scmp.eq.s32.totalorder %s14, 2
      %p31 = por %p29, %p30
      %p32 = scmp.ne.s32.totalorder %s24, %s27
      %p33 = scmp.eq.s32.totalorder %s14, 0
      %p34 = por %p32, %p33
      %p35 = scmp.ne.s32.totalorder %s24, %s27
      %p36 = scmp.eq.s32.totalorder %s19, 2
      %p37 = por %p35, %p36
      %p38 = scmp.ne.s32.totalorder %s27, %s28
      %p39 = scmp.eq.s32.totalorder %s19, 0
      %p40 = por %p38, %p39
      %p41 = scmp.ne.s32.totalorder %s27, %s28
      %p42 = scmp.eq.s32.totalorder %s20, 2
      %p43 = por %p41, %p42
      %p45 = scmp.ne.s32.totalorder %s28, %s44
      %p46 = scmp.eq.s32.totalorder %s20, 0
      %p47 = por %p45, %p46
      %s49 = sadd.s32 %s48, 1
      %p52 = scmp.eq.s32.totalorder %s14, 2
      %p53 = scmp.ne.s32.totalorder %s48, %s50
      %p54 = scmp.eq.s32.totalorder %s14, 0
      %p55 = por %p53, %p54
      %p56 = scmp.ne.s32.totalorder %s48, %s50
      %p57 = scmp.eq.s32.totalorder %s19, 2
      %p58 = por %p56, %p57
      %p59 = scmp.ne.s32.totalorder %s50, %s51
      %p60 = scmp.eq.s32.totalorder %s19, 0
      %p61 = por %p59, %p60
      %p62 = scmp.ne.s32.totalorder %s50, %s51
      %p63 = scmp.eq.s32.totalorder %s20, 2
      %p64 = por %p62, %p63
      %p66 = scmp.ne.s32.totalorder %s51, %s65
      %p67 = scmp.eq.s32.totalorder %s20, 0
      %p68 = por %p66, %p67
      %s70 = sadd.s32 %s69, 1
      %p73 = scmp.eq.s32.totalorder %s14, 2
      %p74 = scmp.ne.s32.totalorder %s69, %s71
      %p75 = scmp.eq.s32.totalorder %s14, 0
      %p76 = por %p74, %p75
      %p77 = scmp.ne.s32.totalorder %s69, %s71
      %p78 = scmp.eq.s32.totalorder %s19, 2
      %p79 = por %p77, %p78
      %p80 = scmp.ne.s32.totalorder %s71, %s72
      %p81 = scmp.eq.s32.totalorder %s19, 0
      %p82 = por %p80, %p81
      %p83 = scmp.ne.s32.totalorder %s71, %s72
      %p84 = scmp.eq.s32.totalorder %s20, 2
      %p85 = por %p83, %p84
      %p87 = scmp.ne.s32.totalorder %s72, %s86
      %p88 = scmp.eq.s32.totalorder %s20, 0
      %p89 = por %p87, %p88
      %s91 = sadd.s32 %s90, 1
      %p94 = scmp.eq.s32.totalorder %s14, 2
      %p95 = scmp.ne.s32.totalorder %s90, %s92
      %p96 = scmp.eq.s32.totalorder %s14, 0
      %p97 = por %p95, %p96
      %p98 = scmp.ne.s32.totalorder %s90, %s92
      %p99 = scmp.eq.s32.totalorder %s19, 2
      %p100 = por %p98, %p99
      %p101 = scmp.ne.s32.totalorder %s92, %s93
      %p102 = scmp.eq.s32.totalorder %s19, 0
      %p103 = por %p101, %p102
      %p104 = scmp.ne.s32.totalorder %s92, %s93
      %p105 = scmp.eq.s32.totalorder %s20, 2
      %p106 = por %p104, %p105
      %p108 = scmp.ne.s32.totalorder %s93, %s107
      %p109 = scmp.eq.s32.totalorder %s20, 0
      %p110 = por %p108, %p109
      %s112 = sadd.s32 %s111, 1
      %p115 = scmp.eq.s32.totalorder %s14, 2
      %p116 = scmp.ne.s32.totalorder %s111, %s113
      %p117 = scmp.eq.s32.totalorder %s14, 0
      %p118 = por %p116, %p117
      %p119 = scmp.ne.s32.totalorder %s111, %s113
      %p120 = scmp.eq.s32.totalorder %s19, 2
      %p121 = por %p119, %p120
      %p122 = scmp.ne.s32.totalorder %s113, %s114
      %p123 = scmp.eq.s32.totalorder %s19, 0
      %p124 = por %p122, %p123
      %p125 = scmp.ne.s32.totalorder %s113, %s114
      %p126 = scmp.eq.s32.totalorder %s20, 2
      %p127 = por %p125, %p126
      %p129 = scmp.ne.s32.totalorder %s114, %s128
      %p130 = scmp.eq.s32.totalorder %s20, 0
      %p131 = por %p129, %p130
      %s132 = ssub.s32 %s14, %s21
      %p133 = scmp.eq.s32.totalorder %s132, 0
      %s135 = sadd.s32 %s134, 1
      %s136 = scalar_select %p133, %s134, %s135
      %p139 = pneg %p133
      %p140 = scmp.eq.s32.totalorder %s14, 2
      %p141 = por %p139, %p140
      %p142 = scmp.ne.s32.totalorder %s134, %s137
      %p143 = scmp.eq.s32.totalorder %s14, 0
      %p144 = por %p142, %p143
      %p145 = scmp.ne.s32.totalorder %s134, %s137
      %p146 = scmp.eq.s32.totalorder %s19, 2
      %p147 = por %p145, %p146
      %p148 = scmp.ne.s32.totalorder %s137, %s138
      %p149 = scmp.eq.s32.totalorder %s19, 0
      %p150 = por %p148, %p149
      %p151 = scmp.ne.s32.totalorder %s137, %s138
      %p152 = scmp.eq.s32.totalorder %s20, 2
      %p153 = por %p151, %p152
      %p155 = scmp.ne.s32.totalorder %s138, %s154
      %p156 = scmp.eq.s32.totalorder %s20, 0
      %p157 = por %p155, %p156
      %p158 = scmp.le.s32.totalorder 1, %s14
      %p159 = scmp.lt.s32.totalorder %s14, 4
      %p160 = pnand %p158, %p159
      %p161 = pneg %p160
      // Predicated region
      $region9: #{tpu_custom_call.1} parent=5 // pred_check
        _
      $region10: #{tpu_custom_call.1} parent=5 // pred_check_branch
        %163 = sbr.rel (%p160) target = $region12
      $region11: #{tpu_custom_call.1} parent=5 // pred_region
        %s164 = ssub.s32 %s14, 1
        // Predicated region
        $region13: #{tpu_custom_call.1} parent=11 // pred_check
          %p165 = pneg %p61
        $region14: #{tpu_custom_call.1} parent=11 // pred_check_branch
          %167 = sbr.rel (%p165) target = $region16
        $region15: #{tpu_custom_call.1} parent=11 // pred_region
          _
        $region16: #{tpu_custom_call.1} parent=11 // pred_fallthru
          _
        // Predicated region
        $region17: #{tpu_custom_call.1} parent=11 // pred_check
          %p168 = pneg %p82
        $region18: #{tpu_custom_call.1} parent=11 // pred_check_branch
          %170 = sbr.rel (%p168) target = $region20
        $region19: #{tpu_custom_call.1} parent=11 // pred_region
          _
        $region20: #{tpu_custom_call.1} parent=11 // pred_fallthru
          _
        // Predicated region
        $region21: #{tpu_custom_call.1} parent=11 // pred_check
          %p171 = pneg %p103
        $region22: #{tpu_custom_call.1} parent=11 // pred_check_branch
          %173 = sbr.rel (%p171) target = $region24
        $region23: #{tpu_custom_call.1} parent=11 // pred_region
          _
        $region24: #{tpu_custom_call.1} parent=11 // pred_fallthru
          _
        // Predicated region
        $region25: #{tpu_custom_call.1} parent=11 // pred_check
          %p174 = pneg %p124
        $region26: #{tpu_custom_call.1} parent=11 // pred_check_branch
          %176 = sbr.rel (%p174) target = $region28
        $region27: #{tpu_custom_call.1} parent=11 // pred_region
          _
        $region28: #{tpu_custom_call.1} parent=11 // pred_fallthru
          _
      $region12: #{tpu_custom_call.1} parent=5 // pred_fallthru
        _
      %p177 = scmp.lt.s32.totalorder %s14, 3
      // Predicated region
      $region29: #{tpu_custom_call.1} parent=5 // pred_check
        %p178 = pneg %p177
      $region30: #{tpu_custom_call.1} parent=5 // pred_check_branch
        %180 = sbr.rel (%p178) target = $region32
      $region31: #{tpu_custom_call.1} parent=5 // pred_region
        // Predicated region
        $region33: #{tpu_custom_call.1} parent=31 // pred_check
          %p181 = pneg %p34
        $region34: #{tpu_custom_call.1} parent=31 // pred_check_branch
          %183 = sbr.rel (%p181) target = $region36
        $region35: #{tpu_custom_call.1} parent=31 // pred_region
          %s184 = sand.u32 %s24, 1
          %s185 = scalar_lea.sflag [#allocation3], %s184
          %s186 = sand.u32 %s24, 1
          %s187 = smul.addr %s186, 16
          %s188 = scalar_lea.vmem [#allocation2], %s187
          %s189 = smul.u32 2, %s14
          %s190 = ssub.s32 5, %s189
          %p191 = scmp.lt.s32.totalorder %s190, 2
          %s192 = scalar_select %p191, %s190, 2
          %s193 = smul.u32 8, %s192
          %s194 = ssub.s32 16, %s193
          %s195 = sshll.u32 %s194, 4
          %196 = vsyncadd %s185, %s195
          %p197 = scmp.ne.s32.totalorder 0, %s193
          %s198 = smul.addr %s189, 8
          %s199 = scalar_lea.hbm %s0, %s198
          %s200 = smul.u32 8, %s192
          %s201 = sshll.u32 %s199, 4
          %s202 = int_to_ptr.hbm [resolvable:$true] %s201
          %s203 = sshll.u32 %s188, 4
          %s204 = int_to_ptr.vmem [resolvable:$true] %s203
          %s205 = sshll.u32 %s200, 4
          %209 = dma.hbm_to_vmem [thread:$0]  (%p197), %s202, %s205, %s204, %s185, 128, 128, 8
        $region36: #{tpu_custom_call.1} parent=31 // pred_fallthru
          _
      $region32: #{tpu_custom_call.1} parent=5 // pred_fallthru
        _
      %p210 = scmp.le.s32.totalorder 1, %s14
      %p211 = scmp.lt.s32.totalorder %s14, 4
      %p212 = pnand %p210, %p211
      %p213 = pneg %p212
      // Predicated region
      $region37: #{tpu_custom_call.1} parent=5 // pred_check
        _
      $region38: #{tpu_custom_call.1} parent=5 // pred_check_branch
        %215 = sbr.rel (%p212) target = $region40
      $region39: #{tpu_custom_call.1} parent=5 // pred_region
        %s216 = ssub.s32 %s14, 1
        %s217 = sand.u32 %s27, 1
        %s218 = scalar_lea.sflag [#allocation3], %s217
        %s219 = sand.u32 %s27, 1
        %s220 = smul.addr %s219, 16
        %s221 = scalar_lea.vmem [#allocation2], %s220
        // Predicated region
        $region41: #{tpu_custom_call.1} parent=39 // pred_check
          %p222 = pneg %p40
        $region42: #{tpu_custom_call.1} parent=39 // pred_check_branch
          %224 = sbr.rel (%p222) target = $region44
        $region43: #{tpu_custom_call.1} parent=39 // pred_region
          %226 = dma.done %s218, 256
        $region44: #{tpu_custom_call.1} parent=39 // pred_fallthru
          _
        %s227 = sand.u32 %s27, 1
        %s228 = scalar_lea.sflag [#allocation3], %s227
        %s229 = sand.u32 %s27, 1
        %s230 = smul.addr %s229, 16
        %s231 = scalar_lea.vmem [#allocation2], %s230
        %p232 = pneg %p40
        %p233 = pneg %p37
        %p234 = pneg %p61
        %p235 = pneg %p58
        %p236 = pneg %p82
        %p237 = pneg %p79
        %p238 = pneg %p103
        %p239 = pneg %p100
        %p240 = pneg %p124
        %p241 = pneg %p121
        %p242 = pneg %p150
        %p243 = pneg %p147
        %s244 = sand.u32 %s137, 1
        %s245 = sand.u32 %s137, 1
        %s246 = smul.addr %s245, 16
        %s247 = scalar_lea.vmem [#allocation4], %s246
        %s248 = smul.u32 2, %s19
        %s249 = ssub.s32 5, %s248
        %p250 = scmp.lt.s32.totalorder %s249, 2
        %s251 = scalar_select %p250, %s249, 2
        %s252 = smul.u32 8, %s251
        %s253 = smul.u32 2, %s19
        %s254 = ssub.s32 5, %s253
        %p255 = scmp.lt.s32.totalorder %s254, 2
        %s256 = scalar_select %p255, %s254, 2
        %s257 = smul.u32 8, %s256
        %v259 = vld [vmem:[%s221] sm:$0xff]
        %v260 = vld [vmem:[%s221 + $0x8] sm:$0xff]
        %v261 = vmax.f32 %v259, 0.0
        %v262 = vmax.f32 %v260, 0.0
        %v263 = vmin.f32 %v261, 1.0
        %v264 = vmin.f32 %v262, 1.0
        %v265 = vpack.c.bf16 %v264, %v263
        %v266 = vld [vmem:[%s1] sm:$0xf]
        %v267 = vld [vmem:[%s1 + $0x4] sm:$0xf]
        %v268 = vld [vmem:[%s1 + $0x8] sm:$0xf]
        %v269 = vld [vmem:[%s1 + $0xc] sm:$0xf]
        %v270 = vld [vmem:[%s1 + $0x10] sm:$0xf]
        %v271 = vld [vmem:[%s1 + $0x14] sm:$0xf]
        %v272 = vld [vmem:[%s1 + $0x18] sm:$0xf]
        %v273 = vld [vmem:[%s1 + $0x1c] sm:$0xf]
        %v274 = vld [vmem:[%s1 + $0x20] sm:$0xf]
        %v275 = vld [vmem:[%s1 + $0x24] sm:$0xf]
        %v276 = vld [vmem:[%s1 + $0x28] sm:$0xf]
        %v277 = vld [vmem:[%s2] sm:$0x1]
        %v279 = vperm.slane %v277, 0
        %v292 = vunpack.c.l.b16 %v266
        %v293 = vunpack.c.l.b16 %v267
        %v294 = vunpack.c.l.b16 %v268
        %v295 = vunpack.c.l.b16 %v269
        %v296 = vunpack.c.l.b16 %v270
        %v297 = vunpack.c.l.b16 %v271
        %v298 = vunpack.c.l.b16 %v272
        %v299 = vunpack.c.l.b16 %v273
        %v300 = vunpack.c.l.b16 %v274
        %v301 = vunpack.c.l.b16 %v275
        %v302 = vunpack.c.l.b16 %v276
        %v303 = vpack.c.b16 %v293, %v292
        %v304 = vpack.c.b16 %v295, %v294
        %v305 = vpack.c.b16 %v297, %v296
        %v306 = vpack.c.b16 %v299, %v298
        %v307 = vpack.c.b16 %v301, %v300
        %v308 = vpack.c.b16 %v302, %v302
        %vm314 = vcmask 719872
        %v316 = vsel %vm314, %v265, 0
        %vm318 = vcmask 1043456
        %v320 = vsel %vm318, %v308, 0
        %322 = vmatpush.bf16.msra.mxu0 0
        %323 = vmatpush.bf16.msra.mxu0 0
        %324 = vmatpush.bf16.msra.mxu0 %v320
        %325 = vmatpush.bf16.msra.mxu0 %v307
        %326 = vmatpush.bf16.msra.mxu0 %v306
        %327 = vmatpush.bf16.msra.mxu0 %v305
        %328 = vmatpush.bf16.msra.mxu0 %v304
        %329 = vmatpush.bf16.msra.mxu0 %v303
        %330 = vmatmul.bf16.gmra.mxu0 %v316
        %v331 = vpop.f32.mrf.mxu0
        %v332 = vadd.f32 %v279, %v331
        %v333 = vpop.f32.mrf.mxu0
        %v334 = vadd.f32 %v279, %v333
        %335 = vdwg.mxu0
        %v336 = vmax.f32 %v332, 0.0
        %v337 = vmax.f32 %v334, 0.0
        %v338 = vmin.f32 %v336, 1.0
        %v339 = vmin.f32 %v337, 1.0
        %v340 = vpack.c.bf16 %v339, %v338
        %v341 = vld [vmem:[%s3] sm:$0xf]
        %v342 = vld [vmem:[%s3 + $0x4] sm:$0xf]
        %v343 = vld [vmem:[%s3 + $0x8] sm:$0xf]
        %v344 = vld [vmem:[%s3 + $0xc] sm:$0xf]
        %v345 = vld [vmem:[%s3 + $0x10] sm:$0xf]
        %v346 = vld [vmem:[%s3 + $0x14] sm:$0xf]
        %v347 = vld [vmem:[%s3 + $0x18] sm:$0xf]
        %v348 = vld [vmem:[%s3 + $0x1c] sm:$0xf]
        %v349 = vld [vmem:[%s3 + $0x20] sm:$0xf]
        %v350 = vld [vmem:[%s3 + $0x24] sm:$0xf]
        %v351 = vld [vmem:[%s3 + $0x28] sm:$0xf]
        %v352 = vld [vmem:[%s3 + $0x2c] sm:$0xf]
        %v353 = vld [vmem:[%s3 + $0x30] sm:$0xf]
        %v354 = vld [vmem:[%s3 + $0x34] sm:$0xf]
        %v355 = vld [vmem:[%s3 + $0x38] sm:$0xf]
        %v356 = vld [vmem:[%s3 + $0x3c] sm:$0xf]
        %v357 = vld [vmem:[%s4] sm:$0x1]
        %v359 = vperm.slane %v357, 0
        %v377 = vunpack.c.l.b16 %v341
        %v378 = vunpack.c.l.b16 %v342
        %v379 = vunpack.c.l.b16 %v343
        %v380 = vunpack.c.l.b16 %v344
        %v381 = vunpack.c.l.b16 %v345
        %v382 = vunpack.c.l.b16 %v346
        %v383 = vunpack.c.l.b16 %v347
        %v384 = vunpack.c.l.b16 %v348
        %v385 = vunpack.c.l.b16 %v349
        %v386 = vunpack.c.l.b16 %v350
        %v387 = vunpack.c.l.b16 %v351
        %v388 = vunpack.c.l.b16 %v352
        %v389 = vunpack.c.l.b16 %v353
        %v390 = vunpack.c.l.b16 %v354
        %v391 = vunpack.c.l.b16 %v355
        %v392 = vunpack.c.l.b16 %v356
        %v393 = vpack.c.b16 %v378, %v377
        %v394 = vpack.c.b16 %v380, %v379
        %v395 = vpack.c.b16 %v382, %v381
        %v396 = vpack.c.b16 %v384, %v383
        %v397 = vpack.c.b16 %v386, %v385
        %v398 = vpack.c.b16 %v388, %v387
        %v399 = vpack.c.b16 %v390, %v389
        %v400 = vpack.c.b16 %v392, %v391
        %409 = vmatpush.bf16.msra.mxu0 %v400
        %410 = vmatpush.bf16.msra.mxu0 %v399
        %411 = vmatpush.bf16.msra.mxu0 %v398
        %412 = vmatpush.bf16.msra.mxu0 %v397
        %413 = vmatpush.bf16.msra.mxu0 %v396
        %414 = vmatpush.bf16.msra.mxu0 %v395
        %415 = vmatpush.bf16.msra.mxu0 %v394
        %416 = vmatpush.bf16.msra.mxu0 %v393
        %417 = vmatmul.bf16.gmra.mxu0 %v340
        %v418 = vpop.f32.mrf.mxu0
        %v419 = vadd.f32 %v359, %v418
        %v420 = vpop.f32.mrf.mxu0
        %v421 = vadd.f32 %v359, %v420
        %422 = vdwg.mxu0
        %v423 = vxor.u32 %v419, 2147483648
        %v424 = vxor.u32 %v421, 2147483648
        %v425 = vmul.f32 %v423, 1.442695
        %v426 = vpow.pop %v425
        %v427 = vmul.f32 %v424, 1.442695
        %v428 = vpow.pop %v427
        %v429 = vadd.f32 %v426, 1.0
        %v430 = vadd.f32 %v428, 1.0
        %v431 = vrcp.pop %v429
        %v432 = vmul.f32 %v429, %v431
        %v433 = vsub.f32 1.0, %v432
        %v434 = vmul.f32 %v431, %v433
        %v435 = vadd.f32 %v431, %v434
        %vm436 = vweird.f32 %v429
        %vm437 = vweird.f32 %v431
        %vm438 = vmor %vm436, %vm437
        %v439 = vsel %vm438, %v431, %v435
        %v440 = vand.u32 2147483647, %v429
        %vm441 = vcmp.eq.f32.partialorder %v440, 8.507059e+37
        %v442 = vand.u32 %v429, 2147483648
        %v443 = vor.u32 1.1754944e-38, %v442
        %v444 = vsel %vm441, %v443, %v439
        %v445 = vmul.f32 1.0, %v444
        %v446 = vrcp.pop %v430
        %v447 = vmul.f32 %v430, %v446
        %v448 = vsub.f32 1.0, %v447
        %v449 = vmul.f32 %v446, %v448
        %v450 = vadd.f32 %v446, %v449
        %vm451 = vweird.f32 %v430
        %vm452 = vweird.f32 %v446
        %vm453 = vmor %vm451, %vm452
        %v454 = vsel %vm453, %v446, %v450
        %v455 = vand.u32 2147483647, %v430
        %vm456 = vcmp.eq.f32.partialorder %v455, 8.507059e+37
        %v457 = vand.u32 %v430, 2147483648
        %v458 = vor.u32 1.1754944e-38, %v457
        %v459 = vsel %vm456, %v458, %v454
        %v460 = vmul.f32 1.0, %v459
        %vm461 = vcmask 130048
        %462 = vst.msk [vmem:[%s247] sm:$0xff] %vm461, %v445
        %463 = vst.msk [vmem:[%s247 + $0x8] sm:$0xff] %vm461, %v460
        %s464 = sand.u32 %s137, 1
        %s465 = sand.u32 %s137, 1
        %s466 = smul.addr %s465, 16
        %s467 = scalar_lea.vmem [#allocation4], %s466
        // Predicated region
        $region45: #{tpu_custom_call.1} parent=39 // pred_check
          %p468 = pneg %p147
        $region46: #{tpu_custom_call.1} parent=39 // pred_check_branch
          %470 = sbr.rel (%p468) target = $region48
        $region47: #{tpu_custom_call.1} parent=39 // pred_region
          %s471 = smul.u32 2, %s19
          %s472 = ssub.s32 5, %s471
          %p473 = scmp.lt.s32.totalorder %s472, 2
          %s474 = scalar_select %p473, %s472, 2
          %s475 = smul.u32 8, %s474
          %p476 = scmp.ne.s32.totalorder 0, %s475
          %s477 = smul.addr %s471, 8
          %s478 = scalar_lea.vmem %s5, %s477
          // Predicated region
          $region49: #{tpu_custom_call.1} parent=47 // pred_check
            %p479 = pneg %p476
          $region50: #{tpu_custom_call.1} parent=47 // pred_check_branch
            %481 = sbr.rel (%p479) target = $region52
          $region51: #{tpu_custom_call.1} parent=47 // pred_region
            // Predicated region
            $region53: #{tpu_custom_call.1} parent=51 // pred_check
              _
            $region54: #{tpu_custom_call.1} parent=51 // pred_check_branch
              %483 = sbr.rel (0) target = $region56
            $region55: #{tpu_custom_call.1} parent=51 // pred_region
              // Predicated region
              $region75: #{tpu_custom_call.1} parent=55 // pred_check
                _
              $region76: #{tpu_custom_call.1} parent=55 // pred_check_branch
                %535 = sbr.rel (0) target = $region78
              $region77: #{tpu_custom_call.1} parent=55 // pred_region
                %s536 = sshrl.u32 %s474, 1
                // While loop
                $region79: #{tpu_custom_call.1} parent=77 // loop_pre_header
                  _
                $region80: #{tpu_custom_call.1} parent=77 // loop_header
                  %s538 = sphi 0, %s540
                  %p539 = scmp.ge.s32.totalorder %s538, %s536
                  %s543 = sphi 0, %s552
                  %s544 = sphi %s467, %s555
                  %s545 = sphi %s478, %s556
                $region81: #{tpu_custom_call.1} parent=77 // loop_header_branch
                  %542 = sbr.rel (%p539) target = $region85
                $region82: #{tpu_custom_call.1} parent=77 // loop_body
                  %v546 = vld [vmem:[%s544] sm:$0xff]
                  %547 = vst [vmem:[%s545] sm:$0xff] %v546
                  %v548 = vld [vmem:[%s544 + $0x8] sm:$0xff]
                  %549 = vst [vmem:[%s545 + $0x8] sm:$0xff] %v548
                  %s550 = sadd.s32 1, %s543
                  %p551 = scmp.ge.s32.totalorder %s550, %s536
                  %s552 = scalar_select %p551, 0, %s550
                  %s553 = smul.u32 %s552, 16
                  %s554 = smul.u32 %s552, 16
                  %s555 = scalar_lea.vmem %s467, %s553 [#allocation4]
                  %s556 = scalar_lea.vmem %s478, %s554
                $region83: #{tpu_custom_call.1} parent=77 // loop_footer
                  %s540 = sadd.s32 %s538, 1
                $region84: #{tpu_custom_call.1} parent=77 // loop_footer_branch
                  %537 = sbr.rel target = $region80
                $region85: #{tpu_custom_call.1} parent=77 // loop_exit
                  _
                %s557 = sshrl.u32 %s474, 1
                %s558 = sand.u32 %s474, 1
                %s559 = smul.u32 %s557, 2
                %s560 = smul.u32 8, %s559
                %s561 = scalar_lea.vmem %s467, %s560 [#allocation4]
                %s562 = smul.u32 8, %s559
                %s563 = scalar_lea.vmem %s478, %s562
                // While loop
                $region86: #{tpu_custom_call.1} parent=77 // loop_pre_header
                  _
                $region87: #{tpu_custom_call.1} parent=77 // loop_header
                  %s565 = sphi 0, %s567
                  %p566 = scmp.ge.s32.totalorder %s565, %s558
                  %s570 = sphi 0, %s577
                  %s571 = sphi %s561, %s580
                  %s572 = sphi %s563, %s581
                $region88: #{tpu_custom_call.1} parent=77 // loop_header_branch
                  %569 = sbr.rel (%p566) target = $region92
                $region89: #{tpu_custom_call.1} parent=77 // loop_body
                  %v573 = vld [vmem:[%s571] sm:$0xff]
                  %574 = vst [vmem:[%s572] sm:$0xff] %v573
                  %s575 = sadd.s32 1, %s570
                  %p576 = scmp.ge.s32.totalorder %s575, %s558
                  %s577 = scalar_select %p576, 0, %s575
                  %s578 = smul.u32 %s577, 8
                  %s579 = smul.u32 %s577, 8
                  %s580 = scalar_lea.vmem %s561, %s578 [#allocation4]
                  %s581 = scalar_lea.vmem %s563, %s579
                $region90: #{tpu_custom_call.1} parent=77 // loop_footer
                  %s567 = sadd.s32 %s565, 1
                $region91: #{tpu_custom_call.1} parent=77 // loop_footer_branch
                  %564 = sbr.rel target = $region87
                $region92: #{tpu_custom_call.1} parent=77 // loop_exit
                  _
              $region78: #{tpu_custom_call.1} parent=55 // pred_fallthru
                _
              // Predicated region
              $region93: #{tpu_custom_call.1} parent=55 // pred_check
                _
              $region94: #{tpu_custom_call.1} parent=55 // pred_check_branch
                %583 = sbr.rel target = $region96
              $region95: #{tpu_custom_call.1} parent=55 // pred_region
                _
              $region96: #{tpu_custom_call.1} parent=55 // pred_fallthru
                _
            $region56: #{tpu_custom_call.1} parent=51 // pred_fallthru
              _
            // Predicated region
            $region57: #{tpu_custom_call.1} parent=51 // pred_check
              _
            $region58: #{tpu_custom_call.1} parent=51 // pred_check_branch
              %485 = sbr.rel target = $region60
            $region59: #{tpu_custom_call.1} parent=51 // pred_region
              %s487 = ssub.s32 256, 1
              %s488 = sshrl.u32 %s474, 1
              // While loop
              $region61: #{tpu_custom_call.1} parent=59 // loop_pre_header
                _
              $region62: #{tpu_custom_call.1} parent=59 // loop_header
                %s490 = sphi 0, %s492
                %p491 = scmp.ge.s32.totalorder %s490, %s488
                %s495 = sphi 0, %s504
                %s496 = sphi %s467, %s507
                %s497 = sphi %s478, %s508
              $region63: #{tpu_custom_call.1} parent=59 // loop_header_branch
                %494 = sbr.rel (%p491) target = $region67
              $region64: #{tpu_custom_call.1} parent=59 // loop_body
                %v498 = vld [vmem:[%s496] sm:%s487]
                %499 = vst [vmem:[%s497] sm:%s487] %v498
                %v500 = vld [vmem:[%s496 + $0x8] sm:%s487]
                %501 = vst [vmem:[%s497 + $0x8] sm:%s487] %v500
                %s502 = sadd.s32 1, %s495
                %p503 = scmp.ge.s32.totalorder %s502, %s488
                %s504 = scalar_select %p503, 0, %s502
                %s505 = smul.u32 %s504, 16
                %s506 = smul.u32 %s504, 16
                %s507 = scalar_lea.vmem %s467, %s505 [#allocation4]
                %s508 = scalar_lea.vmem %s478, %s506
              $region65: #{tpu_custom_call.1} parent=59 // loop_footer
                %s492 = sadd.s32 %s490, 1
              $region66: #{tpu_custom_call.1} parent=59 // loop_footer_branch
                %489 = sbr.rel target = $region62
              $region67: #{tpu_custom_call.1} parent=59 // loop_exit
                _
              %s509 = sshrl.u32 %s474, 1
              %s510 = sand.u32 %s474, 1
              %s511 = smul.u32 %s509, 2
              %s512 = smul.u32 8, %s511
              %s513 = scalar_lea.vmem %s467, %s512 [#allocation4]
              %s514 = smul.u32 8, %s511
              %s515 = scalar_lea.vmem %s478, %s514
              // While loop
              $region68: #{tpu_custom_call.1} parent=59 // loop_pre_header
                _
              $region69: #{tpu_custom_call.1} parent=59 // loop_header
                %s517 = sphi 0, %s519
                %p518 = scmp.ge.s32.totalorder %s517, %s510
                %s522 = sphi 0, %s529
                %s523 = sphi %s513, %s532
                %s524 = sphi %s515, %s533
              $region70: #{tpu_custom_call.1} parent=59 // loop_header_branch
                %521 = sbr.rel (%p518) target = $region74
              $region71: #{tpu_custom_call.1} parent=59 // loop_body
                %v525 = vld [vmem:[%s523] sm:%s487]
                %526 = vst [vmem:[%s524] sm:%s487] %v525
                %s527 = sadd.s32 1, %s522
                %p528 = scmp.ge.s32.totalorder %s527, %s510
                %s529 = scalar_select %p528, 0, %s527
                %s530 = smul.u32 %s529, 8
                %s531 = smul.u32 %s529, 8
                %s532 = scalar_lea.vmem %s513, %s530 [#allocation4]
                %s533 = scalar_lea.vmem %s515, %s531
              $region72: #{tpu_custom_call.1} parent=59 // loop_footer
                %s519 = sadd.s32 %s517, 1
              $region73: #{tpu_custom_call.1} parent=59 // loop_footer_branch
                %516 = sbr.rel target = $region69
              $region74: #{tpu_custom_call.1} parent=59 // loop_exit
                _
            $region60: #{tpu_custom_call.1} parent=51 // pred_fallthru
              _
          $region52: #{tpu_custom_call.1} parent=47 // pred_fallthru
            _
          %584 = vnop
        $region48: #{tpu_custom_call.1} parent=39 // pred_fallthru
          _
      $region40: #{tpu_custom_call.1} parent=5 // pred_fallthru
        _
      %p585 = scmp.le.s32.totalorder 2, %s14
      // Predicated region
      $region97: #{tpu_custom_call.1} parent=5 // pred_check
        %p586 = pneg %p585
      $region98: #{tpu_custom_call.1} parent=5 // pred_check_branch
        %588 = sbr.rel (%p586) target = $region100
      $region99: #{tpu_custom_call.1} parent=5 // pred_region
        %s589 = ssub.s32 %s14, 2
        // Predicated region
        $region101: #{tpu_custom_call.1} parent=99 // pred_check
          %p590 = pneg %p153
        $region102: #{tpu_custom_call.1} parent=99 // pred_check_branch
          %592 = sbr.rel (%p590) target = $region104
        $region103: #{tpu_custom_call.1} parent=99 // pred_region
          %s593 = sand.u32 %s138, 1
          %s594 = sand.u32 %s138, 1
          %s595 = smul.addr %s594, 16
          %s596 = scalar_lea.vmem [#allocation4], %s595
        $region104: #{tpu_custom_call.1} parent=99 // pred_fallthru
          _
      $region100: #{tpu_custom_call.1} parent=5 // pred_fallthru
        _
    $region6: #{tpu_custom_call.1} parent=1 // loop_footer
      %s18 = sadd.s32 1, %s14
    $region7: #{tpu_custom_call.1} parent=1 // loop_footer_branch
      %13 = sbr.rel target = $region3
    $region8: #{tpu_custom_call.1} parent=1 // loop_exit
      _
    %597 = vsyncpa [#allocation3], 1
    %s598 = scalar_lea.sflag [#allocation3], 1
    %599 = vsyncpa %s598, 1

</llo_original>
